<compile_context>
chip_gen: v7x
topology: tpu7x:2x2x1
jax: 0.10.0
libtpu: 0.0.40
codegen_flags: <defaults>
</compile_context>

<pallas_src>
import jax
import jax.numpy as jnp
from jax.experimental import pallas as pl
from jax.experimental.pallas import tpu as pltpu


# ---------------------------------------------------------------------------
# Kernel 1: 3x3 conv (bias folded) + ReLU + global average pool, per batch tile.
# ---------------------------------------------------------------------------
def _conv_pool_kernel(p_ref, cw_ref, pmT_ref, feat_ref):
    # p_ref   : (KKC1, TILE_N*HW) bf16  im2col patches (+ ones row), lane-dense
    # cw_ref  : (Cout, KKC1)      bf16  conv weight with bias folded as last column
    # pmT_ref : (TILE_N, TILE_N*HW) f32 block-diagonal averaging matrix (1/HW entries)
    # feat_ref: (TILE_N, Cout)    f32   pooled features for this batch tile
    y = jnp.dot(cw_ref[...], p_ref[...], preferred_element_type=jnp.float32)
    y = jnp.maximum(y, 0.0)                                  # bias already folded in
    # Average over the HW positions of each image on the MXU (a @ b.T pattern):
    # feat[n, c] = sum_m pmT[n, m] * y[c, m]
    feat_ref[...] = jax.lax.dot_general(
        pmT_ref[...], y,
        dimension_numbers=(((1,), (1,)), ((), ())),
        preferred_element_type=jnp.float32)


# ---------------------------------------------------------------------------
# Kernel 2: Linear -> BatchNorm1d (train-mode batch stats) -> ReLU, whole batch.
# ---------------------------------------------------------------------------
def _make_head_kernel(n_valid, n_padded):
    inv_n = 1.0 / float(n_valid)        # Python float: baked in, not a captured tracer

    def kernel(feat_ref, dw_ref, db_ref, g_ref, bt_ref, out_ref):
        # feat_ref: (NP, Cout) f32, rows >= n_valid are zero padding
        z = jnp.dot(feat_ref[...], dw_ref[...],
                    preferred_element_type=jnp.float32) + db_ref[...]
        valid = (jax.lax.broadcasted_iota(jnp.int32, (n_padded, 1), 0)
                 < n_valid).astype(jnp.float32)
        mean = jnp.sum(z * valid, axis=0, keepdims=True) * inv_n
        diff = (z - mean) * valid
        var = jnp.sum(diff * diff, axis=0, keepdims=True) * inv_n   # biased, as torch
        zn = g_ref[...] * (z - mean) * jax.lax.rsqrt(var + 1e-5) + bt_ref[...]
        out_ref[...] = jnp.maximum(zn, 0.0)                         # activation ReLU
        # nn.Dropout(p=0.0) is the identity.

    return kernel


def _pick_tile_n(n_images, HW, KKC1, Cout, budget_bytes):
    """Largest multiple-of-8 batch tile whose per-step VMEM footprint fits the budget.

    Budget defaults to 24 MiB, which leaves headroom on every generation
    (v7x: 64 MiB physical VMEM; v5e/v6e: 128 MiB)."""
    cap = max(8, ((n_images + 7) // 8) * 8)
    kkc_rows = ((KKC1 + 15) // 16) * 16               # bf16 sublane packing
    best, t = 8, 8
    while t <= cap:
        per_step = (2 * 2 * kkc_rows * t * HW         # patches block, bf16, double-buffered
                    + 4 * Cout * t * HW               # f32 conv+ReLU intermediate
                    + 4 * t * t * HW                  # averaging matrix (resident)
                    + 2 * 4 * t * max(Cout, 128))     # pooled-feature out block (lane-padded)
        if per_step > budget_bytes:
            break
        best = t
        t *= 2
    return min(best, cap)


def image_encoder_forward(x, conv_w, conv_b, dense_w, dense_b, gamma, beta,
                          *, tile_n=None, vmem_budget_bytes=24 << 20):
    """x: (N, H, W, Cin) channels-last. conv_w: (K, K, Cin, Cout) HWIO.
    dense_w: (Cout, Dhid). Returns (N, Dhid)."""
    N, H, W, Cin = x.shape
    K = conv_w.shape[0]
    Cout = conv_w.shape[-1]
    Dhid = dense_w.shape[-1]
    pad = K // 2
    HW = H * W
    KKC = K * K * Cin
    KKC1 = KKC + 1                                   # + ones row for the folded bias

    if tile_n is None:
        tile_n = _pick_tile_n(N, HW, KKC1, Cout, vmem_budget_bytes)
    n_tiles = -(-N // tile_n)
    NP = n_tiles * tile_n

    # --- im2col in XLA (tap order ki-major/kj/cin matches conv_w.reshape(KKC, Cout)),
    #     plus a ones channel so the conv bias rides the MXU matmul. ---
    xp = jnp.pad(x, ((0, 0), (pad, pad), (pad, pad), (0, 0)))
    taps = [xp[:, ki:ki + H, kj:kj + W, :] for ki in range(K) for kj in range(K)]
    patches = jnp.concatenate(taps + [jnp.ones((N, H, W, 1), x.dtype)], axis=-1)
    patches = patches.reshape(N, HW, KKC1)
    if NP != N:
        patches = jnp.pad(patches, ((0, NP - N), (0, 0), (0, 0)))
    # Lane-dense transposed layout: minor dim = NP*HW (multiple of 128). bf16 halves
    # HBM read traffic and VMEM footprint of the dominant stream.
    patches_T = patches.transpose(2, 0, 1).reshape(KKC1, NP * HW).astype(jnp.bfloat16)

    # Conv weight (Cout, KKC) with bias appended as the last column.
    cw_ext = jnp.concatenate(
        [conv_w.reshape(KKC, Cout).T, conv_b.reshape(Cout, 1)], axis=1
    ).astype(jnp.bfloat16)                                           # (Cout, KKC1)

    # Block-diagonal averaging matrix: pmT[n, m] = 1/HW if m belongs to image n.
    m_idx = jnp.arange(tile_n * HW, dtype=jnp.int32)
    pmT = ((m_idx[None, :] // HW) == jnp.arange(tile_n, dtype=jnp.int32)[:, None])
    pmT = pmT.astype(jnp.float32) * (1.0 / HW)                       # (tile_n, tile_n*HW)

    # --- call 1: backbone conv + ReLU + global average pool (batch-parallel grid) ---
    feats = pl.pallas_call(
        _conv_pool_kernel,
        out_shape=jax.ShapeDtypeStruct((NP, Cout), jnp.float32),
        grid=(n_tiles,),
        in_specs=[
            pl.BlockSpec((KKC1, tile_n * HW), lambda i: (0, i)),     # streaming patches
            pl.BlockSpec((Cout, KKC1), lambda i: (0, 0)),            # resident weights
            pl.BlockSpec((tile_n, tile_n * HW), lambda i: (0, 0)),   # resident pool matrix
        ],
        out_specs=pl.BlockSpec((tile_n, Cout), lambda i: (i, 0)),
        compiler_params=pltpu.CompilerParams(
            dimension_semantics=("parallel",),          # megacore-shardable on v7x
            vmem_limit_bytes=32 * 1024 * 1024),
    )(patches_T, cw_ext, pmT)

    # --- call 2: Linear -> BatchNorm1d -> ReLU over the pooled features (f32) ---
    db = dense_b.reshape(1, Dhid).astype(jnp.float32)
    g = gamma.reshape(1, Dhid).astype(jnp.float32)
    bt = beta.reshape(1, Dhid).astype(jnp.float32)

    out = pl.pallas_call(
        _make_head_kernel(N, NP),
        out_shape=jax.ShapeDtypeStruct((NP, Dhid), jnp.float32),
        grid=(1,),
        in_specs=[
            pl.BlockSpec((NP, Cout), lambda i: (0, 0)),
            pl.BlockSpec((Cout, Dhid), lambda i: (0, 0)),
            pl.BlockSpec((1, Dhid), lambda i: (0, 0)),
            pl.BlockSpec((1, Dhid), lambda i: (0, 0)),
            pl.BlockSpec((1, Dhid), lambda i: (0, 0)),
        ],
        out_specs=pl.BlockSpec((NP, Dhid), lambda i: (0, 0)),
        compiler_params=pltpu.CompilerParams(dimension_semantics=("arbitrary",)),
    )(feats, dense_w.astype(jnp.float32), db, g, bt)

    return out[:N]


# ---------------------------------------------------------------------------
# Pure-JAX reference (mirrors the PyTorch forward, all f32).
# ---------------------------------------------------------------------------
def _reference(x, conv_w, conv_b, dense_w, dense_b, gamma, beta):
    y = jax.lax.conv_general_dilated(
        x, conv_w, window_strides=(1, 1), padding="SAME",
        dimension_numbers=("NHWC", "HWIO", "NHWC"))
    y = jnp.maximum(y + conv_b, 0.0)
    y = jnp.mean(y, axis=(1, 2))
    z = y @ dense_w + dense_b
    m = z.mean(0, keepdims=True)
    v = ((z - m) ** 2).mean(0, keepdims=True)
    z = gamma * (z - m) * jax.lax.rsqrt(v + 1e-5) + beta
    return jnp.maximum(z, 0.0)


if __name__ == "__main__":
    key = jax.random.PRNGKey(0)
    k1, k2, k3, k4, k5, k6, k7 = jax.random.split(key, 7)

    N, H, W, Cin = 6, 16, 16, 4          # channels-last input (permute_image=True)
    Cout, Dhid = 32, 16                  # backbone channels, dense_layer_sizes=[16]

    x = jax.random.normal(k1, (N, H, W, Cin), jnp.float32)
    conv_w = 0.1 * jax.random.normal(k2, (3, 3, Cin, Cout), jnp.float32)   # HWIO
    conv_b = 0.1 * jax.random.normal(k3, (Cout,), jnp.float32)
    dense_w = 0.1 * jax.random.normal(k4, (Cout, Dhid), jnp.float32)       # (in, out)
    dense_b = 0.1 * jax.random.normal(k5, (Dhid,), jnp.float32)
    gamma = 1.0 + 0.1 * jax.random.normal(k6, (Dhid,), jnp.float32)        # BN affine
    beta = 0.1 * jax.random.normal(k7, (Dhid,), jnp.float32)

    out = image_encoder_forward(x, conv_w, conv_b, dense_w, dense_b, gamma, beta)
    out = jax.block_until_ready(out)

    ref = _reference(x, conv_w, conv_b, dense_w, dense_b, gamma, beta)
    assert out.shape == (N, Dhid)
    # bf16 conv-matmul operands (per the perf review) => looser tolerance than the
    # previous all-f32 kernel; accumulation and the BN epilogue remain f32.
    assert bool(jnp.allclose(out, ref, atol=5e-2, rtol=5e-2)), "mismatch vs reference"

    print("KERNEL_OK")
</pallas_src>

<mosaic_0001>
module attributes {stable_mosaic.version = 11 : i64} {
  func.func @_conv_pool_kernel(%arg0: i32, %arg1: memref<37x2048xbf16, #tpu.memory_space<vmem>>, %arg2: memref<32x37xbf16, #tpu.memory_space<vmem>>, %arg3: memref<8x2048xf32, #tpu.memory_space<vmem>>, %arg4: memref<8x32xf32, #tpu.memory_space<vmem>>) attributes {dimension_semantics = [#tpu.dimension_semantics<parallel>], iteration_bounds = array<i64: 1>, scalar_prefetch = 0 : i64, scratch_operands = 0 : i64, tpu.core_type = #tpu.core_type<tc>, window_params = [{transform_indices = @transform_0, window_bounds = array<i64: 37, 2048>}, {pipeline_mode = #tpu.pipeline_mode<synchronous>, transform_indices = @transform_1, window_bounds = array<i64: 32, 37>}, {pipeline_mode = #tpu.pipeline_mode<synchronous>, transform_indices = @transform_2, window_bounds = array<i64: 8, 2048>}, {transform_indices = @transform_3, window_bounds = array<i64: 8, 32>}]} {
    %c0 = arith.constant 0 : index
    %c0_0 = arith.constant 0 : index
    %0 = vector.load %arg2[%c0, %c0_0] : memref<32x37xbf16, #tpu.memory_space<vmem>>, vector<32x37xbf16>
    %c0_1 = arith.constant 0 : index
    %c0_2 = arith.constant 0 : index
    %1 = vector.load %arg1[%c0_1, %c0_2] : memref<37x2048xbf16, #tpu.memory_space<vmem>>, vector<37x2048xbf16>
    %cst = arith.constant dense<0.000000e+00> : vector<32x2048xf32>
    %2 = tpu.matmul %0, %1, %cst {dimension_numbers = #tpu.dot_dimension_numbers<[1], [0], [0], [1], [0, 0, 1, 1], [], []>} : vector<32x37xbf16>, vector<37x2048xbf16>, vector<32x2048xf32> -> vector<32x2048xf32>
    %cst_3 = arith.constant 0.000000e+00 : f32
    %3 = vector.broadcast %cst_3 : f32 to vector<32x2048xf32>
    %4 = arith.maximumf %2, %3 : vector<32x2048xf32>
    %c0_4 = arith.constant 0 : index
    %c0_5 = arith.constant 0 : index
    %5 = vector.load %arg3[%c0_4, %c0_5] : memref<8x2048xf32, #tpu.memory_space<vmem>>, vector<8x2048xf32>
    %cst_6 = arith.constant dense<0.000000e+00> : vector<8x32xf32>
    %6 = tpu.matmul %5, %4, %cst_6 {dimension_numbers = #tpu.dot_dimension_numbers<[1], [1], [0], [0], [0, 0, 1, 0], [], []>} : vector<8x2048xf32>, vector<32x2048xf32>, vector<8x32xf32> -> vector<8x32xf32>
    %c0_7 = arith.constant 0 : index
    %c0_8 = arith.constant 0 : index
    %7 = vector.load %arg4[%c0_7, %c0_8] : memref<8x32xf32, #tpu.memory_space<vmem>>, vector<8x32xf32>
    tpu.vector_store %arg4[%c0_7, %c0_8], %6 {strides = array<i32>} : memref<8x32xf32, #tpu.memory_space<vmem>>, vector<8x32xf32>,
    return
  }
  func.func @transform_0(%arg0: i32) -> (i32, i32) {
    %c0_i32 = arith.constant 0 : i32
    %c0_i32_0 = arith.constant 0 : i32
    return %c0_i32, %arg0 : i32, i32
  }
  func.func @transform_1(%arg0: i32) -> (i32, i32) {
    %c0_i32 = arith.constant 0 : i32
    %c0_i32_0 = arith.constant 0 : i32
    %c0_i32_1 = arith.constant 0 : i32
    return %c0_i32, %c0_i32_0 : i32, i32
  }
  func.func @transform_2(%arg0: i32) -> (i32, i32) {
    %c0_i32 = arith.constant 0 : i32
    %c0_i32_0 = arith.constant 0 : i32
    %c0_i32_1 = arith.constant 0 : i32
    return %c0_i32, %c0_i32_0 : i32, i32
  }
  func.func @transform_3(%arg0: i32) -> (i32, i32) {
    %c0_i32 = arith.constant 0 : i32
    %c0_i32_0 = arith.constant 0 : i32
    return %arg0, %c0_i32 : i32, i32
  }
}

</mosaic_0001>

<llo_original>
// kernel: tpu_custom_call.1
$region0: #{tpu_custom_call.1}
  #allocation0 [shape = 'u32[]', space=smem, size = 0x4, offset = 0x4, fixed_abs, tag = 'smem constant byte address 0x4 - core index']
  #allocation1 [shape = 'u32[144,128]{1,0:T(1,128)}', space=vmem, size = 0x12000, scoped, tag = 'internal scratch']
  %s0 = inlined_call_operand.hbm [shape: bf16[37,2048], index: 0, kind: input, shape index: {}]
  %s1 = inlined_call_operand.hbm [shape: bf16[32,37], index: 1, kind: input, shape index: {}]
  %s2 = inlined_call_operand.hbm [shape: f32[8,2048], index: 2, kind: input, shape index: {}]
  %s3 = inlined_call_operand.hbm [shape: f32[8,32], index: 3, kind: output, shape index: {}]
  %s4 = sld [smem:[#allocation0]]
  $region34: #{tpu_custom_call.1} parent=0
    _
  %s6 = ssub.s32 1, %s4
  %s7 = scalar_select 0, %s6, %s4
  $region1: #{tpu_custom_call.1} parent=0
    #allocation2 [shape = 'u8[163840]{0}', space=vmem, size = 0x28000, scoped, tag = 'input window, operand 0, single buffered']
    #allocation3 [shape = 's32[1]{0}', space=sflag, size = 0x4, scoped, tag = 'scoped memory for tpu_custom_call.1']
    #allocation4 [shape = 's32[1]{0}', space=sflag, size = 0x4, scoped, tag = 'scoped memory for tpu_custom_call.1']
    #allocation5 [shape = 'u8[8192]{0}', space=vmem, size = 0x2000, scoped, tag = 'input window, operand 1, single buffered']
    #allocation6 [shape = 's32[1]{0}', space=sflag, size = 0x4, scoped, tag = 'scoped memory for tpu_custom_call.1']
    #allocation7 [shape = 'u8[65536]{0}', space=vmem, size = 0x10000, scoped, tag = 'input window, operand 2, single buffered']
    #allocation8 [shape = 'u8[4096]{0}', space=vmem, size = 0x1000, scoped, tag = 'output window, operand 0, single buffered']
    %8 = vsyncpa [#allocation3], 0
    %9 = vsyncpa [#allocation6], 0
    %10 = vsyncpa [#allocation4], 0
    // Predicated region
    $region2: #{tpu_custom_call.1} parent=1 // pred_check
      _
    $region3: #{tpu_custom_call.1} parent=1 // pred_check_branch
      %12 = sbr.rel (0) target = $region5
    $region4: #{tpu_custom_call.1} parent=1 // pred_region
      %s14 = ssub.s32 5120, 5120
      %15 = vsyncadd [#allocation3], %s14
      %s16 = sshll.u32 [#allocation2], 4
      %s17 = int_to_ptr.vmem [resolvable:$true] %s16
      %22 = dma.hbm_to_vmem [thread:$0]  %s0, 5120, %s17, [#allocation3], 1024, 1024, 64
    $region5: #{tpu_custom_call.1} parent=1 // pred_fallthru
      _
    // Predicated region
    $region6: #{tpu_custom_call.1} parent=1 // pred_check
      _
    $region7: #{tpu_custom_call.1} parent=1 // pred_check_branch
      %24 = sbr.rel (0) target = $region9
    $region8: #{tpu_custom_call.1} parent=1 // pred_region
      %s26 = ssub.s32 256, 256
      %27 = vsyncadd [#allocation6], %s26
      %s28 = sshll.u32 [#allocation5], 4
      %s29 = int_to_ptr.vmem [resolvable:$true] %s28
      %34 = dma.hbm_to_vmem [thread:$0]  %s1, 256, %s29, [#allocation6], 64, 64, 4
    $region9: #{tpu_custom_call.1} parent=1 // pred_fallthru
      _
    // Predicated region
    $region10: #{tpu_custom_call.1} parent=1 // pred_check
      _
    $region11: #{tpu_custom_call.1} parent=1 // pred_check_branch
      %36 = sbr.rel (0) target = $region13
    $region12: #{tpu_custom_call.1} parent=1 // pred_region
      %s38 = ssub.s32 2048, 2048
      %39 = vsyncadd [#allocation6], %s38
      %s41 = sshll.u32 [#allocation7], 4
      %s42 = int_to_ptr.vmem [resolvable:$true] %s41
      %44 = dma.hbm_to_vmem [thread:$0]  %s2, 2048, %s42, [#allocation6]
    $region13: #{tpu_custom_call.1} parent=1 // pred_fallthru
      _
    // Predicated region
    $region14: #{tpu_custom_call.1} parent=1 // pred_check
      _
    $region15: #{tpu_custom_call.1} parent=1 // pred_check_branch
      %46 = sbr.rel (0) target = $region17
    $region16: #{tpu_custom_call.1} parent=1 // pred_region
      %47 = dma.done [#allocation3], 5120
    $region17: #{tpu_custom_call.1} parent=1 // pred_fallthru
      _
    // Predicated region
    $region18: #{tpu_custom_call.1} parent=1 // pred_check
      _
    $region19: #{tpu_custom_call.1} parent=1 // pred_check_branch
      %49 = sbr.rel (0) target = $region21
    $region20: #{tpu_custom_call.1} parent=1 // pred_region
      %50 = dma.done [#allocation6], 256
    $region21: #{tpu_custom_call.1} parent=1 // pred_fallthru
      _
    // Predicated region
    $region22: #{tpu_custom_call.1} parent=1 // pred_check
      _
    $region23: #{tpu_custom_call.1} parent=1 // pred_check_branch
      %52 = sbr.rel (0) target = $region25
    $region24: #{tpu_custom_call.1} parent=1 // pred_region
      %53 = dma.done [#allocation6], 2048
    $region25: #{tpu_custom_call.1} parent=1 // pred_fallthru
      _
    %v55 = vld [vmem:[#allocation5] sm:$0xf]
    %v56 = vld [vmem:[#allocation5 + $0x4] sm:$0xf]
    %v57 = vld [vmem:[#allocation5 + $0x8] sm:$0xf]
    %v58 = vld [vmem:[#allocation5 + $0xc] sm:$0xf]
    %v59 = vld [vmem:[#allocation2] sm:$0xff]
    %v60 = vld [vmem:[#allocation2 + $0x8] sm:$0xff]
    %v61 = vld [vmem:[#allocation2 + $0x10] sm:$0xff]
    %v62 = vld [vmem:[#allocation2 + $0x18] sm:$0xff]
    %v63 = vld [vmem:[#allocation2 + $0x20] sm:$0xff]
    %v64 = vld [vmem:[#allocation2 + $0x28] sm:$0xff]
    %v65 = vld [vmem:[#allocation2 + $0x30] sm:$0xff]
    %v66 = vld [vmem:[#allocation2 + $0x38] sm:$0xff]
    %v67 = vld [vmem:[#allocation2 + $0x40] sm:$0xff]
    %v68 = vld [vmem:[#allocation2 + $0x48] sm:$0xff]
    %v69 = vld [vmem:[#allocation2 + $0x50] sm:$0xff]
    %v70 = vld [vmem:[#allocation2 + $0x58] sm:$0xff]
    %v71 = vld [vmem:[#allocation2 + $0x60] sm:$0xff]
    %v72 = vld [vmem:[#allocation2 + $0x68] sm:$0xff]
    %v73 = vld [vmem:[#allocation2 + $0x70] sm:$0xff]
    %v74 = vld [vmem:[#allocation2 + $0x78] sm:$0xff]
    %v75 = vld [vmem:[#allocation2 + $0x80] sm:$0xff]
    %v76 = vld [vmem:[#allocation2 + $0x88] sm:$0xff]
    %v77 = vld [vmem:[#allocation2 + $0x90] sm:$0xff]
    %v78 = vld [vmem:[#allocation2 + $0x98] sm:$0xff]
    %v79 = vld [vmem:[#allocation2 + $0xa0] sm:$0xff]
    %v80 = vld [vmem:[#allocation2 + $0xa8] sm:$0xff]
    %v81 = vld [vmem:[#allocation2 + $0xb0] sm:$0xff]
    %v82 = vld [vmem:[#allocation2 + $0xb8] sm:$0xff]
    %v83 = vld [vmem:[#allocation2 + $0xc0] sm:$0xff]
    %v84 = vld [vmem:[#allocation2 + $0xc8] sm:$0xff]
    %v85 = vld [vmem:[#allocation2 + $0xd0] sm:$0xff]
    %v86 = vld [vmem:[#allocation2 + $0xd8] sm:$0xff]
    %v87 = vld [vmem:[#allocation2 + $0xe0] sm:$0xff]
    %v88 = vld [vmem:[#allocation2 + $0xe8] sm:$0xff]
    %v89 = vld [vmem:[#allocation2 + $0xf0] sm:$0xff]
    %v90 = vld [vmem:[#allocation2 + $0xf8] sm:$0xff]
    %v91 = vld [vmem:[#allocation2 + $0x100] sm:$0x77]
    %v92 = vld [vmem:[#allocation2 + $0x108] sm:$0x77]
    %v93 = vld [vmem:[#allocation2 + $0x110] sm:$0x77]
    %v94 = vld [vmem:[#allocation2 + $0x118] sm:$0x77]
    %v95 = vld [vmem:[#allocation2 + $0x120] sm:$0x77]
    %v96 = vld [vmem:[#allocation2 + $0x128] sm:$0x77]
    %v97 = vld [vmem:[#allocation2 + $0x130] sm:$0x77]
    %v98 = vld [vmem:[#allocation2 + $0x138] sm:$0x77]
    %v103 = vunpack.c.l.b16 %v55
    %v104 = vunpack.c.l.b16 %v56
    %v105 = vunpack.c.l.b16 %v57
    %v106 = vunpack.c.l.b16 %v58
    %v107 = vpack.c.b16 %v104, %v103
    %v108 = vpack.c.b16 %v106, %v105
    %v149 = vunpack.c.l.b16 %v59
    %v150 = vunpack.c.h.b16 %v59
    %v151 = vunpack.c.l.b16 %v60
    %v152 = vunpack.c.h.b16 %v60
    %v153 = vunpack.c.l.b16 %v61
    %v154 = vunpack.c.h.b16 %v61
    %v155 = vunpack.c.l.b16 %v62
    %v156 = vunpack.c.h.b16 %v62
    %v157 = vunpack.c.l.b16 %v63
    %v158 = vunpack.c.h.b16 %v63
    %v159 = vunpack.c.l.b16 %v64
    %v160 = vunpack.c.h.b16 %v64
    %v161 = vunpack.c.l.b16 %v65
    %v162 = vunpack.c.h.b16 %v65
    %v163 = vunpack.c.l.b16 %v66
    %v164 = vunpack.c.h.b16 %v66
    %v165 = vunpack.c.l.b16 %v67
    %v166 = vunpack.c.h.b16 %v67
    %v167 = vunpack.c.l.b16 %v68
    %v168 = vunpack.c.h.b16 %v68
    %v169 = vunpack.c.l.b16 %v69
    %v170 = vunpack.c.h.b16 %v69
    %v171 = vunpack.c.l.b16 %v70
    %v172 = vunpack.c.h.b16 %v70
    %v173 = vunpack.c.l.b16 %v71
    %v174 = vunpack.c.h.b16 %v71
    %v175 = vunpack.c.l.b16 %v72
    %v176 = vunpack.c.h.b16 %v72
    %v177 = vunpack.c.l.b16 %v73
    %v178 = vunpack.c.h.b16 %v73
    %v179 = vunpack.c.l.b16 %v74
    %v180 = vunpack.c.h.b16 %v74
    %v181 = vunpack.c.l.b16 %v75
    %v182 = vunpack.c.h.b16 %v75
    %v183 = vunpack.c.l.b16 %v76
    %v184 = vunpack.c.h.b16 %v76
    %v185 = vunpack.c.l.b16 %v77
    %v186 = vunpack.c.h.b16 %v77
    %v187 = vunpack.c.l.b16 %v78
    %v188 = vunpack.c.h.b16 %v78
    %v189 = vunpack.c.l.b16 %v79
    %v190 = vunpack.c.h.b16 %v79
    %v191 = vunpack.c.l.b16 %v80
    %v192 = vunpack.c.h.b16 %v80
    %v193 = vunpack.c.l.b16 %v81
    %v194 = vunpack.c.h.b16 %v81
    %v195 = vunpack.c.l.b16 %v82
    %v196 = vunpack.c.h.b16 %v82
    %v197 = vunpack.c.l.b16 %v83
    %v198 = vunpack.c.h.b16 %v83
    %v199 = vunpack.c.l.b16 %v84
    %v200 = vunpack.c.h.b16 %v84
    %v201 = vunpack.c.l.b16 %v85
    %v202 = vunpack.c.h.b16 %v85
    %v203 = vunpack.c.l.b16 %v86
    %v204 = vunpack.c.h.b16 %v86
    %v205 = vunpack.c.l.b16 %v87
    %v206 = vunpack.c.h.b16 %v87
    %v207 = vunpack.c.l.b16 %v88
    %v208 = vunpack.c.h.b16 %v88
    %v209 = vunpack.c.l.b16 %v89
    %v210 = vunpack.c.h.b16 %v89
    %v211 = vunpack.c.l.b16 %v90
    %v212 = vunpack.c.h.b16 %v90
    %v213 = vunpack.c.l.b16 %v91
    %v214 = vunpack.c.h.b16 %v91
    %v215 = vunpack.c.l.b16 %v92
    %v216 = vunpack.c.h.b16 %v92
    %v217 = vunpack.c.l.b16 %v93
    %v218 = vunpack.c.h.b16 %v93
    %v219 = vunpack.c.l.b16 %v94
    %v220 = vunpack.c.h.b16 %v94
    %v221 = vunpack.c.l.b16 %v95
    %v222 = vunpack.c.h.b16 %v95
    %v223 = vunpack.c.l.b16 %v96
    %v224 = vunpack.c.h.b16 %v96
    %v225 = vunpack.c.l.b16 %v97
    %v226 = vunpack.c.h.b16 %v97
    %v227 = vunpack.c.l.b16 %v98
    %v228 = vunpack.c.h.b16 %v98
    %v229 = vpack.c.b16 %v165, %v149
    %v230 = vpack.c.b16 %v166, %v150
    %v231 = vpack.c.b16 %v167, %v151
    %v232 = vpack.c.b16 %v168, %v152
    %v233 = vpack.c.b16 %v169, %v153
    %v234 = vpack.c.b16 %v170, %v154
    %v235 = vpack.c.b16 %v171, %v155
    %v236 = vpack.c.b16 %v172, %v156
    %v237 = vpack.c.b16 %v173, %v157
    %v238 = vpack.c.b16 %v174, %v158
    %v239 = vpack.c.b16 %v175, %v159
    %v240 = vpack.c.b16 %v176, %v160
    %v241 = vpack.c.b16 %v177, %v161
    %v242 = vpack.c.b16 %v178, %v162
    %v243 = vpack.c.b16 %v179, %v163
    %v244 = vpack.c.b16 %v180, %v164
    %v245 = vpack.c.b16 %v197, %v181
    %v246 = vpack.c.b16 %v198, %v182
    %v247 = vpack.c.b16 %v199, %v183
    %v248 = vpack.c.b16 %v200, %v184
    %v249 = vpack.c.b16 %v201, %v185
    %v250 = vpack.c.b16 %v202, %v186
    %v251 = vpack.c.b16 %v203, %v187
    %v252 = vpack.c.b16 %v204, %v188
    %v253 = vpack.c.b16 %v205, %v189
    %v254 = vpack.c.b16 %v206, %v190
    %v255 = vpack.c.b16 %v207, %v191
    %v256 = vpack.c.b16 %v208, %v192
    %v257 = vpack.c.b16 %v209, %v193
    %v258 = vpack.c.b16 %v210, %v194
    %v259 = vpack.c.b16 %v211, %v195
    %v260 = vpack.c.b16 %v212, %v196
    %v261 = vpack.c.b16 %v213, %v213
    %v262 = vpack.c.b16 %v214, %v214
    %v263 = vpack.c.b16 %v215, %v215
    %v264 = vpack.c.b16 %v216, %v216
    %v265 = vpack.c.b16 %v217, %v217
    %v266 = vpack.c.b16 %v218, %v218
    %v267 = vpack.c.b16 %v219, %v219
    %v268 = vpack.c.b16 %v220, %v220
    %v269 = vpack.c.b16 %v221, %v221
    %v270 = vpack.c.b16 %v222, %v222
    %v271 = vpack.c.b16 %v223, %v223
    %v272 = vpack.c.b16 %v224, %v224
    %v273 = vpack.c.b16 %v225, %v225
    %v274 = vpack.c.b16 %v226, %v226
    %v275 = vpack.c.b16 %v227, %v227
    %v276 = vpack.c.b16 %v228, %v228
    %vm309 = vcmask 302080
    %v311 = vsel %vm309, %v107, 0
    %v314 = vsel %vm309, %v108, 0
    %vm316 = vcmask 1041408
    %vm317 = vcmask 1042432
    %v318 = vsel %vm316, 4294967295, 65535
    %v319 = vsel %vm317, %v318, 0
    %v321 = vand.u32 %v261, %v319
    %v324 = vand.u32 %v262, %v319
    %v327 = vand.u32 %v263, %v319
    %v330 = vand.u32 %v264, %v319
    %v333 = vand.u32 %v265, %v319
    %v336 = vand.u32 %v266, %v319
    %v339 = vand.u32 %v267, %v319
    %v342 = vand.u32 %v268, %v319
    %v345 = vand.u32 %v269, %v319
    %v348 = vand.u32 %v270, %v319
    %v351 = vand.u32 %v271, %v319
    %v354 = vand.u32 %v272, %v319
    %v357 = vand.u32 %v273, %v319
    %v360 = vand.u32 %v274, %v319
    %v363 = vand.u32 %v275, %v319
    %v366 = vand.u32 %v276, %v319
    %368 = vmatprep.subr.bf16.mxu0 %v230
    %369 = vmatpush1.bf16.msra.mxu0 %v229
    %370 = vmatprep.subr.bf16.mxu0 %v246
    %371 = vmatpush1.bf16.msra.mxu0 %v245
    %372 = vmatprep.subr.bf16.mxu0 %v324
    %373 = vmatpush1.bf16.msra.mxu0 %v321
    %374 = vmatprep.subr.bf16.mxu0 0
    %375 = vmatpush1.bf16.msra.mxu0 0
    %376 = vmatprep.subr.bf16.mxu0 0
    %377 = vmatpush1.bf16.msra.mxu0 0
    %378 = vmatprep.subr.bf16.mxu0 0
    %379 = vmatpush1.bf16.msra.mxu0 0
    %380 = vmatprep.subr.bf16.mxu0 0
    %381 = vmatpush1.bf16.msra.mxu0 0
    %382 = vmatprep.subr.bf16.mxu0 0
    %383 = vmatpush1.bf16.msra.mxu0 0
    %384 = vmatprep.subr.bf16.mxu0 0
    %385 = vmatpush1.bf16.msra.mxu0 0
    %386 = vmatprep.subr.bf16.mxu0 0
    %387 = vmatpush1.bf16.msra.mxu0 0
    %388 = vmatprep.subr.bf16.mxu0 0
    %389 = vmatpush1.bf16.msra.mxu0 0
    %390 = vmatprep.subr.bf16.mxu0 0
    %391 = vmatpush1.bf16.msra.mxu0 0
    %392 = vmatprep.subr.bf16.mxu0 0
    %393 = vmatpush1.bf16.msra.mxu0 0
    %394 = vmatprep.subr.bf16.mxu0 0
    %395 = vmatpush1.bf16.msra.mxu0 0
    %396 = vmatprep.subr.bf16.mxu0 0
    %397 = vmatpush1.bf16.msra.mxu0 0
    %398 = vmatprep.subr.bf16.mxu0 0
    %399 = vmatpush1.bf16.msra.mxu0 0
    %400 = vmatprep.mubr.bf16.mxu0 0
    %401 = vmatmul.mubr.bf16.gmra.mrb[0].mxu0 %v311
    %v402 = vpop.f32.mrb[0].mxu0
    %v403 = vadd.f32 0.0, %v402
    %v404 = vpop.f32.mrb[0].mxu0
    %v405 = vadd.f32 0.0, %v404
    %v406 = vpop.f32.mrb[0].mxu0
    %v407 = vadd.f32 0.0, %v406
    %v408 = vpop.f32.mrb[0].mxu0
    %v409 = vadd.f32 0.0, %v408
    %410 = vmatprep.mubr.bf16.mxu0 0
    %411 = vmatmul.mubr.bf16.gmra.mrb[0].mxu0 %v314
    %v412 = vpop.f32.mrb[0].mxu0
    %v413 = vadd.f32 0.0, %v412
    %v414 = vpop.f32.mrb[0].mxu0
    %v415 = vadd.f32 0.0, %v414
    %v416 = vpop.f32.mrb[0].mxu0
    %v417 = vadd.f32 0.0, %v416
    %v418 = vpop.f32.mrb[0].mxu0
    %v419 = vadd.f32 0.0, %v418
    %420 = vdwg.mxu0
    %421 = vmatprep.subr.bf16.mxu0 %v232
    %422 = vmatpush1.bf16.msra.mxu0 %v231
    %423 = vmatprep.subr.bf16.mxu0 %v248
    %424 = vmatpush1.bf16.msra.mxu0 %v247
    %425 = vmatprep.subr.bf16.mxu0 %v330
    %426 = vmatpush1.bf16.msra.mxu0 %v327
    %427 = vmatprep.subr.bf16.mxu0 0
    %428 = vmatpush1.bf16.msra.mxu0 0
    %429 = vmatprep.subr.bf16.mxu0 0
    %430 = vmatpush1.bf16.msra.mxu0 0
    %431 = vmatprep.subr.bf16.mxu0 0
    %432 = vmatpush1.bf16.msra.mxu0 0
    %433 = vmatprep.subr.bf16.mxu0 0
    %434 = vmatpush1.bf16.msra.mxu0 0
    %435 = vmatprep.subr.bf16.mxu0 0
    %436 = vmatpush1.bf16.msra.mxu0 0
    %437 = vmatprep.subr.bf16.mxu0 0
    %438 = vmatpush1.bf16.msra.mxu0 0
    %439 = vmatprep.subr.bf16.mxu0 0
    %440 = vmatpush1.bf16.msra.mxu0 0
    %441 = vmatprep.subr.bf16.mxu0 0
    %442 = vmatpush1.bf16.msra.mxu0 0
    %443 = vmatprep.subr.bf16.mxu0 0
    %444 = vmatpush1.bf16.msra.mxu0 0
    %445 = vmatprep.subr.bf16.mxu0 0
    %446 = vmatpush1.bf16.msra.mxu0 0
    %447 = vmatprep.subr.bf16.mxu0 0
    %448 = vmatpush1.bf16.msra.mxu0 0
    %449 = vmatprep.subr.bf16.mxu0 0
    %450 = vmatpush1.bf16.msra.mxu0 0
    %451 = vmatprep.subr.bf16.mxu0 0
    %452 = vmatpush1.bf16.msra.mxu0 0
    %453 = vmatprep.mubr.bf16.mxu0 0
    %454 = vmatmul.mubr.bf16.gmra.mrb[0].mxu0 %v311
    %v455 = vpop.f32.mrb[0].mxu0
    %v456 = vadd.f32 0.0, %v455
    %v457 = vpop.f32.mrb[0].mxu0
    %v458 = vadd.f32 0.0, %v457
    %v459 = vpop.f32.mrb[0].mxu0
    %v460 = vadd.f32 0.0, %v459
    %v461 = vpop.f32.mrb[0].mxu0
    %v462 = vadd.f32 0.0, %v461
    %463 = vmatprep.mubr.bf16.mxu0 0
    %464 = vmatmul.mubr.bf16.gmra.mrb[0].mxu0 %v314
    %v465 = vpop.f32.mrb[0].mxu0
    %v466 = vadd.f32 0.0, %v465
    %v467 = vpop.f32.mrb[0].mxu0
    %v468 = vadd.f32 0.0, %v467
    %v469 = vpop.f32.mrb[0].mxu0
    %v470 = vadd.f32 0.0, %v469
    %v471 = vpop.f32.mrb[0].mxu0
    %v472 = vadd.f32 0.0, %v471
    %473 = vdwg.mxu0
    %474 = vmatprep.subr.bf16.mxu0 %v234
    %475 = vmatpush1.bf16.msra.mxu0 %v233
    %476 = vmatprep.subr.bf16.mxu0 %v250
    %477 = vmatpush1.bf16.msra.mxu0 %v249
    %478 = vmatprep.subr.bf16.mxu0 %v336
    %479 = vmatpush1.bf16.msra.mxu0 %v333
    %480 = vmatprep.subr.bf16.mxu0 0
    %481 = vmatpush1.bf16.msra.mxu0 0
    %482 = vmatprep.subr.bf16.mxu0 0
    %483 = vmatpush1.bf16.msra.mxu0 0
    %484 = vmatprep.subr.bf16.mxu0 0
    %485 = vmatpush1.bf16.msra.mxu0 0
    %486 = vmatprep.subr.bf16.mxu0 0
    %487 = vmatpush1.bf16.msra.mxu0 0
    %488 = vmatprep.subr.bf16.mxu0 0
    %489 = vmatpush1.bf16.msra.mxu0 0
    %490 = vmatprep.subr.bf16.mxu0 0
    %491 = vmatpush1.bf16.msra.mxu0 0
    %492 = vmatprep.subr.bf16.mxu0 0
    %493 = vmatpush1.bf16.msra.mxu0 0
    %494 = vmatprep.subr.bf16.mxu0 0
    %495 = vmatpush1.bf16.msra.mxu0 0
    %496 = vmatprep.subr.bf16.mxu0 0
    %497 = vmatpush1.bf16.msra.mxu0 0
    %498 = vmatprep.subr.bf16.mxu0 0
    %499 = vmatpush1.bf16.msra.mxu0 0
    %500 = vmatprep.subr.bf16.mxu0 0
    %501 = vmatpush1.bf16.msra.mxu0 0
    %502 = vmatprep.subr.bf16.mxu0 0
    %503 = vmatpush1.bf16.msra.mxu0 0
    %504 = vmatprep.subr.bf16.mxu0 0
    %505 = vmatpush1.bf16.msra.mxu0 0
    %506 = vmatprep.mubr.bf16.mxu0 0
    %507 = vmatmul.mubr.bf16.gmra.mrb[0].mxu0 %v311
    %v508 = vpop.f32.mrb[0].mxu0
    %v509 = vadd.f32 0.0, %v508
    %v510 = vpop.f32.mrb[0].mxu0
    %v511 = vadd.f32 0.0, %v510
    %v512 = vpop.f32.mrb[0].mxu0
    %v513 = vadd.f32 0.0, %v512
    %v514 = vpop.f32.mrb[0].mxu0
    %v515 = vadd.f32 0.0, %v514
    %516 = vmatprep.mubr.bf16.mxu0 0
    %517 = vmatmul.mubr.bf16.gmra.mrb[0].mxu0 %v314
    %v518 = vpop.f32.mrb[0].mxu0
    %v519 = vadd.f32 0.0, %v518
    %v520 = vpop.f32.mrb[0].mxu0
    %v521 = vadd.f32 0.0, %v520
    %v522 = vpop.f32.mrb[0].mxu0
    %v523 = vadd.f32 0.0, %v522
    %v524 = vpop.f32.mrb[0].mxu0
    %v525 = vadd.f32 0.0, %v524
    %526 = vdwg.mxu0
    %527 = vmatprep.subr.bf16.mxu0 %v236
    %528 = vmatpush1.bf16.msra.mxu0 %v235
    %529 = vmatprep.subr.bf16.mxu0 %v252
    %530 = vmatpush1.bf16.msra.mxu0 %v251
    %531 = vmatprep.subr.bf16.mxu0 %v342
    %532 = vmatpush1.bf16.msra.mxu0 %v339
    %533 = vmatprep.subr.bf16.mxu0 0
    %534 = vmatpush1.bf16.msra.mxu0 0
    %535 = vmatprep.subr.bf16.mxu0 0
    %536 = vmatpush1.bf16.msra.mxu0 0
    %537 = vmatprep.subr.bf16.mxu0 0
    %538 = vmatpush1.bf16.msra.mxu0 0
    %539 = vmatprep.subr.bf16.mxu0 0
    %540 = vmatpush1.bf16.msra.mxu0 0
    %541 = vmatprep.subr.bf16.mxu0 0
    %542 = vmatpush1.bf16.msra.mxu0 0
    %543 = vmatprep.subr.bf16.mxu0 0
    %544 = vmatpush1.bf16.msra.mxu0 0
    %545 = vmatprep.subr.bf16.mxu0 0
    %546 = vmatpush1.bf16.msra.mxu0 0
    %547 = vmatprep.subr.bf16.mxu0 0
    %548 = vmatpush1.bf16.msra.mxu0 0
    %549 = vmatprep.subr.bf16.mxu0 0
    %550 = vmatpush1.bf16.msra.mxu0 0
    %551 = vmatprep.subr.bf16.mxu0 0
    %552 = vmatpush1.bf16.msra.mxu0 0
    %553 = vmatprep.subr.bf16.mxu0 0
    %554 = vmatpush1.bf16.msra.mxu0 0
    %555 = vmatprep.subr.bf16.mxu0 0
    %556 = vmatpush1.bf16.msra.mxu0 0
    %557 = vmatprep.subr.bf16.mxu0 0
    %558 = vmatpush1.bf16.msra.mxu0 0
    %559 = vmatprep.mubr.bf16.mxu0 0
    %560 = vmatmul.mubr.bf16.gmra.mrb[0].mxu0 %v311
    %v561 = vpop.f32.mrb[0].mxu0
    %v562 = vadd.f32 0.0, %v561
    %v563 = vpop.f32.mrb[0].mxu0
    %v564 = vadd.f32 0.0, %v563
    %v565 = vpop.f32.mrb[0].mxu0
    %v566 = vadd.f32 0.0, %v565
    %v567 = vpop.f32.mrb[0].mxu0
    %v568 = vadd.f32 0.0, %v567
    %569 = vmatprep.mubr.bf16.mxu0 0
    %570 = vmatmul.mubr.bf16.gmra.mrb[0].mxu0 %v314
    %v571 = vpop.f32.mrb[0].mxu0
    %v572 = vadd.f32 0.0, %v571
    %v573 = vpop.f32.mrb[0].mxu0
    %v574 = vadd.f32 0.0, %v573
    %v575 = vpop.f32.mrb[0].mxu0
    %v576 = vadd.f32 0.0, %v575
    %v577 = vpop.f32.mrb[0].mxu0
    %v578 = vadd.f32 0.0, %v577
    %579 = vdwg.mxu0
    %580 = vmatprep.subr.bf16.mxu0 %v238
    %581 = vmatpush1.bf16.msra.mxu0 %v237
    %582 = vmatprep.subr.bf16.mxu0 %v254
    %583 = vmatpush1.bf16.msra.mxu0 %v253
    %584 = vmatprep.subr.bf16.mxu0 %v348
    %585 = vmatpush1.bf16.msra.mxu0 %v345
    %586 = vmatprep.subr.bf16.mxu0 0
    %587 = vmatpush1.bf16.msra.mxu0 0
    %588 = vmatprep.subr.bf16.mxu0 0
    %589 = vmatpush1.bf16.msra.mxu0 0
    %590 = vmatprep.subr.bf16.mxu0 0
    %591 = vmatpush1.bf16.msra.mxu0 0
    %592 = vmatprep.subr.bf16.mxu0 0
    %593 = vmatpush1.bf16.msra.mxu0 0
    %594 = vmatprep.subr.bf16.mxu0 0
    %595 = vmatpush1.bf16.msra.mxu0 0
    %596 = vmatprep.subr.bf16.mxu0 0
    %597 = vmatpush1.bf16.msra.mxu0 0
    %598 = vmatprep.subr.bf16.mxu0 0
    %599 = vmatpush1.bf16.msra.mxu0 0
    %600 = vmatprep.subr.bf16.mxu0 0
    %601 = vmatpush1.bf16.msra.mxu0 0
    %602 = vmatprep.subr.bf16.mxu0 0
    %603 = vmatpush1.bf16.msra.mxu0 0
    %604 = vmatprep.subr.bf16.mxu0 0
    %605 = vmatpush1.bf16.msra.mxu0 0
    %606 = vmatprep.subr.bf16.mxu0 0
    %607 = vmatpush1.bf16.msra.mxu0 0
    %608 = vmatprep.subr.bf16.mxu0 0
    %609 = vmatpush1.bf16.msra.mxu0 0
    %610 = vmatprep.subr.bf16.mxu0 0
    %611 = vmatpush1.bf16.msra.mxu0 0
    %612 = vmatprep.mubr.bf16.mxu0 0
    %613 = vmatmul.mubr.bf16.gmra.mrb[0].mxu0 %v311
    %v614 = vpop.f32.mrb[0].mxu0
    %v615 = vadd.f32 0.0, %v614
    %v616 = vpop.f32.mrb[0].mxu0
    %v617 = vadd.f32 0.0, %v616
    %v618 = vpop.f32.mrb[0].mxu0
    %v619 = vadd.f32 0.0, %v618
    %v620 = vpop.f32.mrb[0].mxu0
    %v621 = vadd.f32 0.0, %v620
    %622 = vmatprep.mubr.bf16.mxu0 0
    %623 = vmatmul.mubr.bf16.gmra.mrb[0].mxu0 %v314
    %v624 = vpop.f32.mrb[0].mxu0
    %v625 = vadd.f32 0.0, %v624
    %v626 = vpop.f32.mrb[0].mxu0
    %v627 = vadd.f32 0.0, %v626
    %v628 = vpop.f32.mrb[0].mxu0
    %v629 = vadd.f32 0.0, %v628
    %v630 = vpop.f32.mrb[0].mxu0
    %v631 = vadd.f32 0.0, %v630
    %632 = vdwg.mxu0
    %633 = vmatprep.subr.bf16.mxu0 %v240
    %634 = vmatpush1.bf16.msra.mxu0 %v239
    %635 = vmatprep.subr.bf16.mxu0 %v256
    %636 = vmatpush1.bf16.msra.mxu0 %v255
    %637 = vmatprep.subr.bf16.mxu0 %v354
    %638 = vmatpush1.bf16.msra.mxu0 %v351
    %639 = vmatprep.subr.bf16.mxu0 0
    %640 = vmatpush1.bf16.msra.mxu0 0
    %641 = vmatprep.subr.bf16.mxu0 0
    %642 = vmatpush1.bf16.msra.mxu0 0
    %643 = vmatprep.subr.bf16.mxu0 0
    %644 = vmatpush1.bf16.msra.mxu0 0
    %645 = vmatprep.subr.bf16.mxu0 0
    %646 = vmatpush1.bf16.msra.mxu0 0
    %647 = vmatprep.subr.bf16.mxu0 0
    %648 = vmatpush1.bf16.msra.mxu0 0
    %649 = vmatprep.subr.bf16.mxu0 0
    %650 = vmatpush1.bf16.msra.mxu0 0
    %651 = vmatprep.subr.bf16.mxu0 0
    %652 = vmatpush1.bf16.msra.mxu0 0
    %653 = vmatprep.subr.bf16.mxu0 0
    %654 = vmatpush1.bf16.msra.mxu0 0
    %655 = vmatprep.subr.bf16.mxu0 0
    %656 = vmatpush1.bf16.msra.mxu0 0
    %657 = vmatprep.subr.bf16.mxu0 0
    %658 = vmatpush1.bf16.msra.mxu0 0
    %659 = vmatprep.subr.bf16.mxu0 0
    %660 = vmatpush1.bf16.msra.mxu0 0
    %661 = vmatprep.subr.bf16.mxu0 0
    %662 = vmatpush1.bf16.msra.mxu0 0
    %663 = vmatprep.subr.bf16.mxu0 0
    %664 = vmatpush1.bf16.msra.mxu0 0
    %665 = vmatprep.mubr.bf16.mxu0 0
    %666 = vmatmul.mubr.bf16.gmra.mrb[0].mxu0 %v311
    %v667 = vpop.f32.mrb[0].mxu0
    %v668 = vadd.f32 0.0, %v667
    %v669 = vpop.f32.mrb[0].mxu0
    %v670 = vadd.f32 0.0, %v669
    %v671 = vpop.f32.mrb[0].mxu0
    %v672 = vadd.f32 0.0, %v671
    %v673 = vpop.f32.mrb[0].mxu0
    %v674 = vadd.f32 0.0, %v673
    %675 = vmatprep.mubr.bf16.mxu0 0
    %676 = vmatmul.mubr.bf16.gmra.mrb[0].mxu0 %v314
    %v677 = vpop.f32.mrb[0].mxu0
    %v678 = vadd.f32 0.0, %v677
    %v679 = vpop.f32.mrb[0].mxu0
    %v680 = vadd.f32 0.0, %v679
    %v681 = vpop.f32.mrb[0].mxu0
    %v682 = vadd.f32 0.0, %v681
    %v683 = vpop.f32.mrb[0].mxu0
    %v684 = vadd.f32 0.0, %v683
    %685 = vdwg.mxu0
    %686 = vmatprep.subr.bf16.mxu0 %v242
    %687 = vmatpush1.bf16.msra.mxu0 %v241
    %688 = vmatprep.subr.bf16.mxu0 %v258
    %689 = vmatpush1.bf16.msra.mxu0 %v257
    %690 = vmatprep.subr.bf16.mxu0 %v360
    %691 = vmatpush1.bf16.msra.mxu0 %v357
    %692 = vmatprep.subr.bf16.mxu0 0
    %693 = vmatpush1.bf16.msra.mxu0 0
    %694 = vmatprep.subr.bf16.mxu0 0
    %695 = vmatpush1.bf16.msra.mxu0 0
    %696 = vmatprep.subr.bf16.mxu0 0
    %697 = vmatpush1.bf16.msra.mxu0 0
    %698 = vmatprep.subr.bf16.mxu0 0
    %699 = vmatpush1.bf16.msra.mxu0 0
    %700 = vmatprep.subr.bf16.mxu0 0
    %701 = vmatpush1.bf16.msra.mxu0 0
    %702 = vmatprep.subr.bf16.mxu0 0
    %703 = vmatpush1.bf16.msra.mxu0 0
    %704 = vmatprep.subr.bf16.mxu0 0
    %705 = vmatpush1.bf16.msra.mxu0 0
    %706 = vmatprep.subr.bf16.mxu0 0
    %707 = vmatpush1.bf16.msra.mxu0 0
    %708 = vmatprep.subr.bf16.mxu0 0
    %709 = vmatpush1.bf16.msra.mxu0 0
    %710 = vmatprep.subr.bf16.mxu0 0
    %711 = vmatpush1.bf16.msra.mxu0 0
    %712 = vmatprep.subr.bf16.mxu0 0
    %713 = vmatpush1.bf16.msra.mxu0 0
    %714 = vmatprep.subr.bf16.mxu0 0
    %715 = vmatpush1.bf16.msra.mxu0 0
    %716 = vmatprep.subr.bf16.mxu0 0
    %717 = vmatpush1.bf16.msra.mxu0 0
    %718 = vmatprep.mubr.bf16.mxu0 0
    %719 = vmatmul.mubr.bf16.gmra.mrb[0].mxu0 %v311
    %v720 = vpop.f32.mrb[0].mxu0
    %v721 = vadd.f32 0.0, %v720
    %v722 = vpop.f32.mrb[0].mxu0
    %v723 = vadd.f32 0.0, %v722
    %v724 = vpop.f32.mrb[0].mxu0
    %v725 = vadd.f32 0.0, %v724
    %v726 = vpop.f32.mrb[0].mxu0
    %v727 = vadd.f32 0.0, %v726
    %728 = vmatprep.mubr.bf16.mxu0 0
    %729 = vmatmul.mubr.bf16.gmra.mrb[0].mxu0 %v314
    %v730 = vpop.f32.mrb[0].mxu0
    %v731 = vadd.f32 0.0, %v730
    %v732 = vpop.f32.mrb[0].mxu0
    %v733 = vadd.f32 0.0, %v732
    %v734 = vpop.f32.mrb[0].mxu0
    %v735 = vadd.f32 0.0, %v734
    %v736 = vpop.f32.mrb[0].mxu0
    %v737 = vadd.f32 0.0, %v736
    %738 = vdwg.mxu0
    %739 = vmatprep.subr.bf16.mxu0 %v244
    %740 = vmatpush1.bf16.msra.mxu0 %v243
    %741 = vmatprep.subr.bf16.mxu0 %v260
    %742 = vmatpush1.bf16.msra.mxu0 %v259
    %743 = vmatprep.subr.bf16.mxu0 %v366
    %744 = vmatpush1.bf16.msra.mxu0 %v363
    %745 = vmatprep.subr.bf16.mxu0 0
    %746 = vmatpush1.bf16.msra.mxu0 0
    %747 = vmatprep.subr.bf16.mxu0 0
    %748 = vmatpush1.bf16.msra.mxu0 0
    %749 = vmatprep.subr.bf16.mxu0 0
    %750 = vmatpush1.bf16.msra.mxu0 0
    %751 = vmatprep.subr.bf16.mxu0 0
    %752 = vmatpush1.bf16.msra.mxu0 0
    %753 = vmatprep.subr.bf16.mxu0 0
    %754 = vmatpush1.bf16.msra.mxu0 0
    %755 = vmatprep.subr.bf16.mxu0 0
    %756 = vmatpush1.bf16.msra.mxu0 0
    %757 = vmatprep.subr.bf16.mxu0 0
    %758 = vmatpush1.bf16.msra.mxu0 0
    %759 = vmatprep.subr.bf16.mxu0 0
    %760 = vmatpush1.bf16.msra.mxu0 0
    %761 = vmatprep.subr.bf16.mxu0 0
    %762 = vmatpush1.bf16.msra.mxu0 0
    %763 = vmatprep.subr.bf16.mxu0 0
    %764 = vmatpush1.bf16.msra.mxu0 0
    %765 = vmatprep.subr.bf16.mxu0 0
    %766 = vmatpush1.bf16.msra.mxu0 0
    %767 = vmatprep.subr.bf16.mxu0 0
    %768 = vmatpush1.bf16.msra.mxu0 0
    %769 = vmatprep.subr.bf16.mxu0 0
    %770 = vmatpush1.bf16.msra.mxu0 0
    %771 = vmatprep.mubr.bf16.mxu0 0
    %772 = vmatmul.mubr.bf16.gmra.mrb[0].mxu0 %v311
    %v773 = vpop.f32.mrb[0].mxu0
    %v774 = vadd.f32 0.0, %v773
    %v775 = vpop.f32.mrb[0].mxu0
    %v776 = vadd.f32 0.0, %v775
    %v777 = vpop.f32.mrb[0].mxu0
    %v778 = vadd.f32 0.0, %v777
    %v779 = vpop.f32.mrb[0].mxu0
    %v780 = vadd.f32 0.0, %v779
    %781 = vmatprep.mubr.bf16.mxu0 0
    %782 = vmatmul.mubr.bf16.gmra.mrb[0].mxu0 %v314
    %v783 = vpop.f32.mrb[0].mxu0
    %v784 = vadd.f32 0.0, %v783
    %v785 = vpop.f32.mrb[0].mxu0
    %v786 = vadd.f32 0.0, %v785
    %v787 = vpop.f32.mrb[0].mxu0
    %v788 = vadd.f32 0.0, %v787
    %v789 = vpop.f32.mrb[0].mxu0
    %v790 = vadd.f32 0.0, %v789
    %791 = vdwg.mxu0
    %v792 = vmax.f32 %v403, 0.0
    %v793 = vmax.f32 %v405, 0.0
    %v794 = vmax.f32 %v456, 0.0
    %v795 = vmax.f32 %v458, 0.0
    %v796 = vmax.f32 %v509, 0.0
    %v797 = vmax.f32 %v511, 0.0
    %v798 = vmax.f32 %v562, 0.0
    %v799 = vmax.f32 %v564, 0.0
    %v800 = vmax.f32 %v615, 0.0
    %v801 = vmax.f32 %v617, 0.0
    %v802 = vmax.f32 %v668, 0.0
    %v803 = vmax.f32 %v670, 0.0
    %v804 = vmax.f32 %v721, 0.0
    %v805 = vmax.f32 %v723, 0.0
    %v806 = vmax.f32 %v774, 0.0
    %v807 = vmax.f32 %v776, 0.0
    %v808 = vmax.f32 %v407, 0.0
    %v809 = vmax.f32 %v409, 0.0
    %v810 = vmax.f32 %v460, 0.0
    %v811 = vmax.f32 %v462, 0.0
    %v812 = vmax.f32 %v513, 0.0
    %v813 = vmax.f32 %v515, 0.0
    %v814 = vmax.f32 %v566, 0.0
    %v815 = vmax.f32 %v568, 0.0
    %v816 = vmax.f32 %v619, 0.0
    %v817 = vmax.f32 %v621, 0.0
    %v818 = vmax.f32 %v672, 0.0
    %v819 = vmax.f32 %v674, 0.0
    %v820 = vmax.f32 %v725, 0.0
    %v821 = vmax.f32 %v727, 0.0
    %v822 = vmax.f32 %v778, 0.0
    %v823 = vmax.f32 %v780, 0.0
    %v824 = vmax.f32 %v413, 0.0
    %v825 = vmax.f32 %v415, 0.0
    %v826 = vmax.f32 %v466, 0.0
    %v827 = vmax.f32 %v468, 0.0
    %v828 = vmax.f32 %v519, 0.0
    %v829 = vmax.f32 %v521, 0.0
    %v830 = vmax.f32 %v572, 0.0
    %v831 = vmax.f32 %v574, 0.0
    %v832 = vmax.f32 %v625, 0.0
    %v833 = vmax.f32 %v627, 0.0
    %v834 = vmax.f32 %v678, 0.0
    %v835 = vmax.f32 %v680, 0.0
    %v836 = vmax.f32 %v731, 0.0
    %v837 = vmax.f32 %v733, 0.0
    %v838 = vmax.f32 %v784, 0.0
    %v839 = vmax.f32 %v786, 0.0
    %v840 = vmax.f32 %v417, 0.0
    %v841 = vmax.f32 %v419, 0.0
    %v842 = vmax.f32 %v470, 0.0
    %v843 = vmax.f32 %v472, 0.0
    %v844 = vmax.f32 %v523, 0.0
    %v845 = vmax.f32 %v525, 0.0
    %v846 = vmax.f32 %v576, 0.0
    %v847 = vmax.f32 %v578, 0.0
    %v848 = vmax.f32 %v629, 0.0
    %v849 = vmax.f32 %v631, 0.0
    %v850 = vmax.f32 %v682, 0.0
    %v851 = vmax.f32 %v684, 0.0
    %v852 = vmax.f32 %v735, 0.0
    %v853 = vmax.f32 %v737, 0.0
    %v854 = vmax.f32 %v788, 0.0
    %v855 = vmax.f32 %v790, 0.0
    %v856 = vld [vmem:[#allocation7] sm:$0xff]
    %v857 = vld [vmem:[#allocation7 + $0x8] sm:$0xff]
    %v858 = vld [vmem:[#allocation7 + $0x10] sm:$0xff]
    %v859 = vld [vmem:[#allocation7 + $0x18] sm:$0xff]
    %v860 = vld [vmem:[#allocation7 + $0x20] sm:$0xff]
    %v861 = vld [vmem:[#allocation7 + $0x28] sm:$0xff]
    %v862 = vld [vmem:[#allocation7 + $0x30] sm:$0xff]
    %v863 = vld [vmem:[#allocation7 + $0x38] sm:$0xff]
    %v864 = vld [vmem:[#allocation7 + $0x40] sm:$0xff]
    %v865 = vld [vmem:[#allocation7 + $0x48] sm:$0xff]
    %v866 = vld [vmem:[#allocation7 + $0x50] sm:$0xff]
    %v867 = vld [vmem:[#allocation7 + $0x58] sm:$0xff]
    %v868 = vld [vmem:[#allocation7 + $0x60] sm:$0xff]
    %v869 = vld [vmem:[#allocation7 + $0x68] sm:$0xff]
    %v870 = vld [vmem:[#allocation7 + $0x70] sm:$0xff]
    %v871 = vld [vmem:[#allocation7 + $0x78] sm:$0xff]
    %872 = vmatprep.subr.mxu0 %v793
    %873 = vmatpush1.xpose.msra.mxu0 %v792
    %874 = vmatprep.subr.mxu0 %v809
    %875 = vmatpush1.xpose.msra.mxu0 %v808
    %876 = vmatprep.subr.mxu0 %v825
    %877 = vmatpush1.xpose.msra.mxu0 %v824
    %878 = vmatprep.subr.mxu0 %v841
    %879 = vmatpush1.xpose.msra.mxu0 %v840
    %880 = vmatprep.subr.mxu0 0.0
    %881 = vmatpush1.xpose.msra.mxu0 0.0
    %882 = vmatprep.subr.mxu0 0.0
    %883 = vmatpush1.xpose.msra.mxu0 0.0
    %884 = vmatprep.subr.mxu0 0.0
    %885 = vmatpush1.xpose.msra.mxu0 0.0
    %886 = vmatprep.subr.mxu0 0.0
    %887 = vmatpush1.xpose.msra.mxu0 0.0
    %888 = vmatprep.subr.mxu0 0.0
    %889 = vmatpush1.xpose.msra.mxu0 0.0
    %890 = vmatprep.subr.mxu0 0.0
    %891 = vmatpush1.xpose.msra.mxu0 0.0
    %892 = vmatprep.subr.mxu0 0.0
    %893 = vmatpush1.xpose.msra.mxu0 0.0
    %894 = vmatprep.subr.mxu0 0.0
    %895 = vmatpush1.xpose.msra.mxu0 0.0
    %896 = vmatprep.subr.mxu0 0.0
    %897 = vmatpush1.xpose.msra.mxu0 0.0
    %898 = vmatprep.subr.mxu0 0.0
    %899 = vmatpush1.xpose.msra.mxu0 0.0
    %900 = vmatprep.subr.mxu0 0.0
    %901 = vmatpush1.xpose.msra.mxu0 0.0
    %902 = vmatprep.subr.mxu0 0.0
    %903 = vmatpush1.xpose.msra.mxu0 0.0
    %904 = vmatprep.subr.mxu0 0.0
    %905 = vmatpush1.xpose.msra.mxu0 0.0
    %906 = vmatprep.subr.mxu0 0.0
    %907 = vmatpush1.xpose.msra.mxu0 0.0
    %908 = vmatprep.subr.mxu0 0.0
    %909 = vmatpush1.xpose.msra.mxu0 0.0
    %910 = vmatprep.subr.mxu0 0.0
    %911 = vmatpush1.xpose.msra.mxu0 0.0
    %912 = vmatprep.subr.mxu0 0.0
    %913 = vmatpush1.xpose.msra.mxu0 0.0
    %914 = vmatprep.subr.mxu0 0.0
    %915 = vmatpush1.xpose.msra.mxu0 0.0
    %916 = vmatprep.subr.mxu0 0.0
    %917 = vmatpush1.xpose.msra.mxu0 0.0
    %918 = vmatprep.subr.mxu0 0.0
    %919 = vmatpush1.xpose.msra.mxu0 0.0
    %920 = vmatprep.subr.mxu0 0.0
    %921 = vmatpush1.xpose.msra.mxu0 0.0
    %922 = vmatprep.subr.mxu0 0.0
    %923 = vmatpush1.xpose.msra.mxu0 0.0
    %924 = vmatprep.subr.mxu0 0.0
    %925 = vmatpush1.xpose.msra.mxu0 0.0
    %926 = vmatprep.subr.mxu0 0.0
    %927 = vmatpush1.xpose.msra.mxu0 0.0
    %928 = vmatprep.subr.mxu0 0.0
    %929 = vmatpush1.xpose.msra.mxu0 0.0
    %930 = vmatprep.subr.mxu0 0.0
    %931 = vmatpush1.xpose.msra.mxu0 0.0
    %932 = vmatprep.subr.mxu0 0.0
    %933 = vmatpush1.xpose.msra.mxu0 0.0
    %934 = vmatprep.subr.mxu0 0.0
    %935 = vmatpush1.xpose.msra.mxu0 0.0
    %936 = vmatprep.mubr.f32.mxu0 %v857
    %937 = vmatmul.mubr.f32.gmra.mrb[0].mxu0 %v856
    %v938 = vpop.f32.mrb[0].mxu0
    %v939 = vadd.f32 0.0, %v938
    %v940 = vpop.f32.mrb[0].mxu0
    %941 = vdwg.mxu0
    %942 = vmatprep.subr.mxu0 %v795
    %943 = vmatpush1.xpose.msra.mxu0 %v794
    %944 = vmatprep.subr.mxu0 %v811
    %945 = vmatpush1.xpose.msra.mxu0 %v810
    %946 = vmatprep.subr.mxu0 %v827
    %947 = vmatpush1.xpose.msra.mxu0 %v826
    %948 = vmatprep.subr.mxu0 %v843
    %949 = vmatpush1.xpose.msra.mxu0 %v842
    %950 = vmatprep.subr.mxu0 0.0
    %951 = vmatpush1.xpose.msra.mxu0 0.0
    %952 = vmatprep.subr.mxu0 0.0
    %953 = vmatpush1.xpose.msra.mxu0 0.0
    %954 = vmatprep.subr.mxu0 0.0
    %955 = vmatpush1.xpose.msra.mxu0 0.0
    %956 = vmatprep.subr.mxu0 0.0
    %957 = vmatpush1.xpose.msra.mxu0 0.0
    %958 = vmatprep.subr.mxu0 0.0
    %959 = vmatpush1.xpose.msra.mxu0 0.0
    %960 = vmatprep.subr.mxu0 0.0
    %961 = vmatpush1.xpose.msra.mxu0 0.0
    %962 = vmatprep.subr.mxu0 0.0
    %963 = vmatpush1.xpose.msra.mxu0 0.0
    %964 = vmatprep.subr.mxu0 0.0
    %965 = vmatpush1.xpose.msra.mxu0 0.0
    %966 = vmatprep.subr.mxu0 0.0
    %967 = vmatpush1.xpose.msra.mxu0 0.0
    %968 = vmatprep.subr.mxu0 0.0
    %969 = vmatpush1.xpose.msra.mxu0 0.0
    %970 = vmatprep.subr.mxu0 0.0
    %971 = vmatpush1.xpose.msra.mxu0 0.0
    %972 = vmatprep.subr.mxu0 0.0
    %973 = vmatpush1.xpose.msra.mxu0 0.0
    %974 = vmatprep.subr.mxu0 0.0
    %975 = vmatpush1.xpose.msra.mxu0 0.0
    %976 = vmatprep.subr.mxu0 0.0
    %977 = vmatpush1.xpose.msra.mxu0 0.0
    %978 = vmatprep.subr.mxu0 0.0
    %979 = vmatpush1.xpose.msra.mxu0 0.0
    %980 = vmatprep.subr.mxu0 0.0
    %981 = vmatpush1.xpose.msra.mxu0 0.0
    %982 = vmatprep.subr.mxu0 0.0
    %983 = vmatpush1.xpose.msra.mxu0 0.0
    %984 = vmatprep.subr.mxu0 0.0
    %985 = vmatpush1.xpose.msra.mxu0 0.0
    %986 = vmatprep.subr.mxu0 0.0
    %987 = vmatpush1.xpose.msra.mxu0 0.0
    %988 = vmatprep.subr.mxu0 0.0
    %989 = vmatpush1.xpose.msra.mxu0 0.0
    %990 = vmatprep.subr.mxu0 0.0
    %991 = vmatpush1.xpose.msra.mxu0 0.0
    %992 = vmatprep.subr.mxu0 0.0
    %993 = vmatpush1.xpose.msra.mxu0 0.0
    %994 = vmatprep.subr.mxu0 0.0
    %995 = vmatpush1.xpose.msra.mxu0 0.0
    %996 = vmatprep.subr.mxu0 0.0
    %997 = vmatpush1.xpose.msra.mxu0 0.0
    %998 = vmatprep.subr.mxu0 0.0
    %999 = vmatpush1.xpose.msra.mxu0 0.0
    %1000 = vmatprep.subr.mxu0 0.0
    %1001 = vmatpush1.xpose.msra.mxu0 0.0
    %1002 = vmatprep.subr.mxu0 0.0
    %1003 = vmatpush1.xpose.msra.mxu0 0.0
    %1004 = vmatprep.subr.mxu0 0.0
    %1005 = vmatpush1.xpose.msra.mxu0 0.0
    %1006 = vmatprep.mubr.f32.mxu0 %v859
    %1007 = vmatmul.mubr.f32.gmra.mrb[0].mxu0 %v858
    %v1008 = vpop.f32.mrb[0].mxu0
    %v1009 = vadd.f32 %v939, %v1008
    %v1010 = vpop.f32.mrb[0].mxu0
    %1011 = vdwg.mxu0
    %1012 = vmatprep.subr.mxu0 %v797
    %1013 = vmatpush1.xpose.msra.mxu0 %v796
    %1014 = vmatprep.subr.mxu0 %v813
    %1015 = vmatpush1.xpose.msra.mxu0 %v812
    %1016 = vmatprep.subr.mxu0 %v829
    %1017 = vmatpush1.xpose.msra.mxu0 %v828
    %1018 = vmatprep.subr.mxu0 %v845
    %1019 = vmatpush1.xpose.msra.mxu0 %v844
    %1020 = vmatprep.subr.mxu0 0.0
    %1021 = vmatpush1.xpose.msra.mxu0 0.0
    %1022 = vmatprep.subr.mxu0 0.0
    %1023 = vmatpush1.xpose.msra.mxu0 0.0
    %1024 = vmatprep.subr.mxu0 0.0
    %1025 = vmatpush1.xpose.msra.mxu0 0.0
    %1026 = vmatprep.subr.mxu0 0.0
    %1027 = vmatpush1.xpose.msra.mxu0 0.0
    %1028 = vmatprep.subr.mxu0 0.0
    %1029 = vmatpush1.xpose.msra.mxu0 0.0
    %1030 = vmatprep.subr.mxu0 0.0
    %1031 = vmatpush1.xpose.msra.mxu0 0.0
    %1032 = vmatprep.subr.mxu0 0.0
    %1033 = vmatpush1.xpose.msra.mxu0 0.0
    %1034 = vmatprep.subr.mxu0 0.0
    %1035 = vmatpush1.xpose.msra.mxu0 0.0
    %1036 = vmatprep.subr.mxu0 0.0
    %1037 = vmatpush1.xpose.msra.mxu0 0.0
    %1038 = vmatprep.subr.mxu0 0.0
    %1039 = vmatpush1.xpose.msra.mxu0 0.0
    %1040 = vmatprep.subr.mxu0 0.0
    %1041 = vmatpush1.xpose.msra.mxu0 0.0
    %1042 = vmatprep.subr.mxu0 0.0
    %1043 = vmatpush1.xpose.msra.mxu0 0.0
    %1044 = vmatprep.subr.mxu0 0.0
    %1045 = vmatpush1.xpose.msra.mxu0 0.0
    %1046 = vmatprep.subr.mxu0 0.0
    %1047 = vmatpush1.xpose.msra.mxu0 0.0
    %1048 = vmatprep.subr.mxu0 0.0
    %1049 = vmatpush1.xpose.msra.mxu0 0.0
    %1050 = vmatprep.subr.mxu0 0.0
    %1051 = vmatpush1.xpose.msra.mxu0 0.0
    %1052 = vmatprep.subr.mxu0 0.0
    %1053 = vmatpush1.xpose.msra.mxu0 0.0
    %1054 = vmatprep.subr.mxu0 0.0
    %1055 = vmatpush1.xpose.msra.mxu0 0.0
    %1056 = vmatprep.subr.mxu0 0.0
    %1057 = vmatpush1.xpose.msra.mxu0 0.0
    %1058 = vmatprep.subr.mxu0 0.0
    %1059 = vmatpush1.xpose.msra.mxu0 0.0
    %1060 = vmatprep.subr.mxu0 0.0
    %1061 = vmatpush1.xpose.msra.mxu0 0.0
    %1062 = vmatprep.subr.mxu0 0.0
    %1063 = vmatpush1.xpose.msra.mxu0 0.0
    %1064 = vmatprep.subr.mxu0 0.0
    %1065 = vmatpush1.xpose.msra.mxu0 0.0
    %1066 = vmatprep.subr.mxu0 0.0
    %1067 = vmatpush1.xpose.msra.mxu0 0.0
    %1068 = vmatprep.subr.mxu0 0.0
    %1069 = vmatpush1.xpose.msra.mxu0 0.0
    %1070 = vmatprep.subr.mxu0 0.0
    %1071 = vmatpush1.xpose.msra.mxu0 0.0
    %1072 = vmatprep.subr.mxu0 0.0
    %1073 = vmatpush1.xpose.msra.mxu0 0.0
    %1074 = vmatprep.subr.mxu0 0.0
    %1075 = vmatpush1.xpose.msra.mxu0 0.0
    %1076 = vmatprep.mubr.f32.mxu0 %v861
    %1077 = vmatmul.mubr.f32.gmra.mrb[0].mxu0 %v860
    %v1078 = vpop.f32.mrb[0].mxu0
    %v1079 = vadd.f32 %v1009, %v1078
    %v1080 = vpop.f32.mrb[0].mxu0
    %1081 = vdwg.mxu0
    %1082 = vmatprep.subr.mxu0 %v799
    %1083 = vmatpush1.xpose.msra.mxu0 %v798
    %1084 = vmatprep.subr.mxu0 %v815
    %1085 = vmatpush1.xpose.msra.mxu0 %v814
    %1086 = vmatprep.subr.mxu0 %v831
    %1087 = vmatpush1.xpose.msra.mxu0 %v830
    %1088 = vmatprep.subr.mxu0 %v847
    %1089 = vmatpush1.xpose.msra.mxu0 %v846
    %1090 = vmatprep.subr.mxu0 0.0
    %1091 = vmatpush1.xpose.msra.mxu0 0.0
    %1092 = vmatprep.subr.mxu0 0.0
    %1093 = vmatpush1.xpose.msra.mxu0 0.0
    %1094 = vmatprep.subr.mxu0 0.0
    %1095 = vmatpush1.xpose.msra.mxu0 0.0
    %1096 = vmatprep.subr.mxu0 0.0
    %1097 = vmatpush1.xpose.msra.mxu0 0.0
    %1098 = vmatprep.subr.mxu0 0.0
    %1099 = vmatpush1.xpose.msra.mxu0 0.0
    %1100 = vmatprep.subr.mxu0 0.0
    %1101 = vmatpush1.xpose.msra.mxu0 0.0
    %1102 = vmatprep.subr.mxu0 0.0
    %1103 = vmatpush1.xpose.msra.mxu0 0.0
    %1104 = vmatprep.subr.mxu0 0.0
    %1105 = vmatpush1.xpose.msra.mxu0 0.0
    %1106 = vmatprep.subr.mxu0 0.0
    %1107 = vmatpush1.xpose.msra.mxu0 0.0
    %1108 = vmatprep.subr.mxu0 0.0
    %1109 = vmatpush1.xpose.msra.mxu0 0.0
    %1110 = vmatprep.subr.mxu0 0.0
    %1111 = vmatpush1.xpose.msra.mxu0 0.0
    %1112 = vmatprep.subr.mxu0 0.0
    %1113 = vmatpush1.xpose.msra.mxu0 0.0
    %1114 = vmatprep.subr.mxu0 0.0
    %1115 = vmatpush1.xpose.msra.mxu0 0.0
    %1116 = vmatprep.subr.mxu0 0.0
    %1117 = vmatpush1.xpose.msra.mxu0 0.0
    %1118 = vmatprep.subr.mxu0 0.0
    %1119 = vmatpush1.xpose.msra.mxu0 0.0
    %1120 = vmatprep.subr.mxu0 0.0
    %1121 = vmatpush1.xpose.msra.mxu0 0.0
    %1122 = vmatprep.subr.mxu0 0.0
    %1123 = vmatpush1.xpose.msra.mxu0 0.0
    %1124 = vmatprep.subr.mxu0 0.0
    %1125 = vmatpush1.xpose.msra.mxu0 0.0
    %1126 = vmatprep.subr.mxu0 0.0
    %1127 = vmatpush1.xpose.msra.mxu0 0.0
    %1128 = vmatprep.subr.mxu0 0.0
    %1129 = vmatpush1.xpose.msra.mxu0 0.0
    %1130 = vmatprep.subr.mxu0 0.0
    %1131 = vmatpush1.xpose.msra.mxu0 0.0
    %1132 = vmatprep.subr.mxu0 0.0
    %1133 = vmatpush1.xpose.msra.mxu0 0.0
    %1134 = vmatprep.subr.mxu0 0.0
    %1135 = vmatpush1.xpose.msra.mxu0 0.0
    %1136 = vmatprep.subr.mxu0 0.0
    %1137 = vmatpush1.xpose.msra.mxu0 0.0
    %1138 = vmatprep.subr.mxu0 0.0
    %1139 = vmatpush1.xpose.msra.mxu0 0.0
    %1140 = vmatprep.subr.mxu0 0.0
    %1141 = vmatpush1.xpose.msra.mxu0 0.0
    %1142 = vmatprep.subr.mxu0 0.0
    %1143 = vmatpush1.xpose.msra.mxu0 0.0
    %1144 = vmatprep.subr.mxu0 0.0
    %1145 = vmatpush1.xpose.msra.mxu0 0.0
    %1146 = vmatprep.mubr.f32.mxu0 %v863
    %1147 = vmatmul.mubr.f32.gmra.mrb[0].mxu0 %v862
    %v1148 = vpop.f32.mrb[0].mxu0
    %v1149 = vadd.f32 %v1079, %v1148
    %v1150 = vpop.f32.mrb[0].mxu0
    %1151 = vdwg.mxu0
    %1152 = vmatprep.subr.mxu0 %v801
    %1153 = vmatpush1.xpose.msra.mxu0 %v800
    %1154 = vmatprep.subr.mxu0 %v817
    %1155 = vmatpush1.xpose.msra.mxu0 %v816
    %1156 = vmatprep.subr.mxu0 %v833
    %1157 = vmatpush1.xpose.msra.mxu0 %v832
    %1158 = vmatprep.subr.mxu0 %v849
    %1159 = vmatpush1.xpose.msra.mxu0 %v848
    %1160 = vmatprep.subr.mxu0 0.0
    %1161 = vmatpush1.xpose.msra.mxu0 0.0
    %1162 = vmatprep.subr.mxu0 0.0
    %1163 = vmatpush1.xpose.msra.mxu0 0.0
    %1164 = vmatprep.subr.mxu0 0.0
    %1165 = vmatpush1.xpose.msra.mxu0 0.0
    %1166 = vmatprep.subr.mxu0 0.0
    %1167 = vmatpush1.xpose.msra.mxu0 0.0
    %1168 = vmatprep.subr.mxu0 0.0
    %1169 = vmatpush1.xpose.msra.mxu0 0.0
    %1170 = vmatprep.subr.mxu0 0.0
    %1171 = vmatpush1.xpose.msra.mxu0 0.0
    %1172 = vmatprep.subr.mxu0 0.0
    %1173 = vmatpush1.xpose.msra.mxu0 0.0
    %1174 = vmatprep.subr.mxu0 0.0
    %1175 = vmatpush1.xpose.msra.mxu0 0.0
    %1176 = vmatprep.subr.mxu0 0.0
    %1177 = vmatpush1.xpose.msra.mxu0 0.0
    %1178 = vmatprep.subr.mxu0 0.0
    %1179 = vmatpush1.xpose.msra.mxu0 0.0
    %1180 = vmatprep.subr.mxu0 0.0
    %1181 = vmatpush1.xpose.msra.mxu0 0.0
    %1182 = vmatprep.subr.mxu0 0.0
    %1183 = vmatpush1.xpose.msra.mxu0 0.0
    %1184 = vmatprep.subr.mxu0 0.0
    %1185 = vmatpush1.xpose.msra.mxu0 0.0
    %1186 = vmatprep.subr.mxu0 0.0
    %1187 = vmatpush1.xpose.msra.mxu0 0.0
    %1188 = vmatprep.subr.mxu0 0.0
    %1189 = vmatpush1.xpose.msra.mxu0 0.0
    %1190 = vmatprep.subr.mxu0 0.0
    %1191 = vmatpush1.xpose.msra.mxu0 0.0
    %1192 = vmatprep.subr.mxu0 0.0
    %1193 = vmatpush1.xpose.msra.mxu0 0.0
    %1194 = vmatprep.subr.mxu0 0.0
    %1195 = vmatpush1.xpose.msra.mxu0 0.0
    %1196 = vmatprep.subr.mxu0 0.0
    %1197 = vmatpush1.xpose.msra.mxu0 0.0
    %1198 = vmatprep.subr.mxu0 0.0
    %1199 = vmatpush1.xpose.msra.mxu0 0.0
    %1200 = vmatprep.subr.mxu0 0.0
    %1201 = vmatpush1.xpose.msra.mxu0 0.0
    %1202 = vmatprep.subr.mxu0 0.0
    %1203 = vmatpush1.xpose.msra.mxu0 0.0
    %1204 = vmatprep.subr.mxu0 0.0
    %1205 = vmatpush1.xpose.msra.mxu0 0.0
    %1206 = vmatprep.subr.mxu0 0.0
    %1207 = vmatpush1.xpose.msra.mxu0 0.0
    %1208 = vmatprep.subr.mxu0 0.0
    %1209 = vmatpush1.xpose.msra.mxu0 0.0
    %1210 = vmatprep.subr.mxu0 0.0
    %1211 = vmatpush1.xpose.msra.mxu0 0.0
    %1212 = vmatprep.subr.mxu0 0.0
    %1213 = vmatpush1.xpose.msra.mxu0 0.0
    %1214 = vmatprep.subr.mxu0 0.0
    %1215 = vmatpush1.xpose.msra.mxu0 0.0
    %1216 = vmatprep.mubr.f32.mxu0 %v865
    %1217 = vmatmul.mubr.f32.gmra.mrb[0].mxu0 %v864
    %v1218 = vpop.f32.mrb[0].mxu0
    %v1219 = vadd.f32 %v1149, %v1218
    %v1220 = vpop.f32.mrb[0].mxu0
    %1221 = vdwg.mxu0
    %1222 = vmatprep.subr.mxu0 %v803
    %1223 = vmatpush1.xpose.msra.mxu0 %v802
    %1224 = vmatprep.subr.mxu0 %v819
    %1225 = vmatpush1.xpose.msra.mxu0 %v818
    %1226 = vmatprep.subr.mxu0 %v835
    %1227 = vmatpush1.xpose.msra.mxu0 %v834
    %1228 = vmatprep.subr.mxu0 %v851
    %1229 = vmatpush1.xpose.msra.mxu0 %v850
    %1230 = vmatprep.subr.mxu0 0.0
    %1231 = vmatpush1.xpose.msra.mxu0 0.0
    %1232 = vmatprep.subr.mxu0 0.0
    %1233 = vmatpush1.xpose.msra.mxu0 0.0
    %1234 = vmatprep.subr.mxu0 0.0
    %1235 = vmatpush1.xpose.msra.mxu0 0.0
    %1236 = vmatprep.subr.mxu0 0.0
    %1237 = vmatpush1.xpose.msra.mxu0 0.0
    %1238 = vmatprep.subr.mxu0 0.0
    %1239 = vmatpush1.xpose.msra.mxu0 0.0
    %1240 = vmatprep.subr.mxu0 0.0
    %1241 = vmatpush1.xpose.msra.mxu0 0.0
    %1242 = vmatprep.subr.mxu0 0.0
    %1243 = vmatpush1.xpose.msra.mxu0 0.0
    %1244 = vmatprep.subr.mxu0 0.0
    %1245 = vmatpush1.xpose.msra.mxu0 0.0
    %1246 = vmatprep.subr.mxu0 0.0
    %1247 = vmatpush1.xpose.msra.mxu0 0.0
    %1248 = vmatprep.subr.mxu0 0.0
    %1249 = vmatpush1.xpose.msra.mxu0 0.0
    %1250 = vmatprep.subr.mxu0 0.0
    %1251 = vmatpush1.xpose.msra.mxu0 0.0
    %1252 = vmatprep.subr.mxu0 0.0
    %1253 = vmatpush1.xpose.msra.mxu0 0.0
    %1254 = vmatprep.subr.mxu0 0.0
    %1255 = vmatpush1.xpose.msra.mxu0 0.0
    %1256 = vmatprep.subr.mxu0 0.0
    %1257 = vmatpush1.xpose.msra.mxu0 0.0
    %1258 = vmatprep.subr.mxu0 0.0
    %1259 = vmatpush1.xpose.msra.mxu0 0.0
    %1260 = vmatprep.subr.mxu0 0.0
    %1261 = vmatpush1.xpose.msra.mxu0 0.0
    %1262 = vmatprep.subr.mxu0 0.0
    %1263 = vmatpush1.xpose.msra.mxu0 0.0
    %1264 = vmatprep.subr.mxu0 0.0
    %1265 = vmatpush1.xpose.msra.mxu0 0.0
    %1266 = vmatprep.subr.mxu0 0.0
    %1267 = vmatpush1.xpose.msra.mxu0 0.0
    %1268 = vmatprep.subr.mxu0 0.0
    %1269 = vmatpush1.xpose.msra.mxu0 0.0
    %1270 = vmatprep.subr.mxu0 0.0
    %1271 = vmatpush1.xpose.msra.mxu0 0.0
    %1272 = vmatprep.subr.mxu0 0.0
    %1273 = vmatpush1.xpose.msra.mxu0 0.0
    %1274 = vmatprep.subr.mxu0 0.0
    %1275 = vmatpush1.xpose.msra.mxu0 0.0
    %1276 = vmatprep.subr.mxu0 0.0
    %1277 = vmatpush1.xpose.msra.mxu0 0.0
    %1278 = vmatprep.subr.mxu0 0.0
    %1279 = vmatpush1.xpose.msra.mxu0 0.0
    %1280 = vmatprep.subr.mxu0 0.0
    %1281 = vmatpush1.xpose.msra.mxu0 0.0
    %1282 = vmatprep.subr.mxu0 0.0
    %1283 = vmatpush1.xpose.msra.mxu0 0.0
    %1284 = vmatprep.subr.mxu0 0.0
    %1285 = vmatpush1.xpose.msra.mxu0 0.0
    %1286 = vmatprep.mubr.f32.mxu0 %v867
    %1287 = vmatmul.mubr.f32.gmra.mrb[0].mxu0 %v866
    %v1288 = vpop.f32.mrb[0].mxu0
    %v1289 = vadd.f32 %v1219, %v1288
    %v1290 = vpop.f32.mrb[0].mxu0
    %1291 = vdwg.mxu0
    %1292 = vmatprep.subr.mxu0 %v805
    %1293 = vmatpush1.xpose.msra.mxu0 %v804
    %1294 = vmatprep.subr.mxu0 %v821
    %1295 = vmatpush1.xpose.msra.mxu0 %v820
    %1296 = vmatprep.subr.mxu0 %v837
    %1297 = vmatpush1.xpose.msra.mxu0 %v836
    %1298 = vmatprep.subr.mxu0 %v853
    %1299 = vmatpush1.xpose.msra.mxu0 %v852
    %1300 = vmatprep.subr.mxu0 0.0
    %1301 = vmatpush1.xpose.msra.mxu0 0.0
    %1302 = vmatprep.subr.mxu0 0.0
    %1303 = vmatpush1.xpose.msra.mxu0 0.0
    %1304 = vmatprep.subr.mxu0 0.0
    %1305 = vmatpush1.xpose.msra.mxu0 0.0
    %1306 = vmatprep.subr.mxu0 0.0
    %1307 = vmatpush1.xpose.msra.mxu0 0.0
    %1308 = vmatprep.subr.mxu0 0.0
    %1309 = vmatpush1.xpose.msra.mxu0 0.0
    %1310 = vmatprep.subr.mxu0 0.0
    %1311 = vmatpush1.xpose.msra.mxu0 0.0
    %1312 = vmatprep.subr.mxu0 0.0
    %1313 = vmatpush1.xpose.msra.mxu0 0.0
    %1314 = vmatprep.subr.mxu0 0.0
    %1315 = vmatpush1.xpose.msra.mxu0 0.0
    %1316 = vmatprep.subr.mxu0 0.0
    %1317 = vmatpush1.xpose.msra.mxu0 0.0
    %1318 = vmatprep.subr.mxu0 0.0
    %1319 = vmatpush1.xpose.msra.mxu0 0.0
    %1320 = vmatprep.subr.mxu0 0.0
    %1321 = vmatpush1.xpose.msra.mxu0 0.0
    %1322 = vmatprep.subr.mxu0 0.0
    %1323 = vmatpush1.xpose.msra.mxu0 0.0
    %1324 = vmatprep.subr.mxu0 0.0
    %1325 = vmatpush1.xpose.msra.mxu0 0.0
    %1326 = vmatprep.subr.mxu0 0.0
    %1327 = vmatpush1.xpose.msra.mxu0 0.0
    %1328 = vmatprep.subr.mxu0 0.0
    %1329 = vmatpush1.xpose.msra.mxu0 0.0
    %1330 = vmatprep.subr.mxu0 0.0
    %1331 = vmatpush1.xpose.msra.mxu0 0.0
    %1332 = vmatprep.subr.mxu0 0.0
    %1333 = vmatpush1.xpose.msra.mxu0 0.0
    %1334 = vmatprep.subr.mxu0 0.0
    %1335 = vmatpush1.xpose.msra.mxu0 0.0
    %1336 = vmatprep.subr.mxu0 0.0
    %1337 = vmatpush1.xpose.msra.mxu0 0.0
    %1338 = vmatprep.subr.mxu0 0.0
    %1339 = vmatpush1.xpose.msra.mxu0 0.0
    %1340 = vmatprep.subr.mxu0 0.0
    %1341 = vmatpush1.xpose.msra.mxu0 0.0
    %1342 = vmatprep.subr.mxu0 0.0
    %1343 = vmatpush1.xpose.msra.mxu0 0.0
    %1344 = vmatprep.subr.mxu0 0.0
    %1345 = vmatpush1.xpose.msra.mxu0 0.0
    %1346 = vmatprep.subr.mxu0 0.0
    %1347 = vmatpush1.xpose.msra.mxu0 0.0
    %1348 = vmatprep.subr.mxu0 0.0
    %1349 = vmatpush1.xpose.msra.mxu0 0.0
    %1350 = vmatprep.subr.mxu0 0.0
    %1351 = vmatpush1.xpose.msra.mxu0 0.0
    %1352 = vmatprep.subr.mxu0 0.0
    %1353 = vmatpush1.xpose.msra.mxu0 0.0
    %1354 = vmatprep.subr.mxu0 0.0
    %1355 = vmatpush1.xpose.msra.mxu0 0.0
    %1356 = vmatprep.mubr.f32.mxu0 %v869
    %1357 = vmatmul.mubr.f32.gmra.mrb[0].mxu0 %v868
    %v1358 = vpop.f32.mrb[0].mxu0
    %v1359 = vadd.f32 %v1289, %v1358
    %v1360 = vpop.f32.mrb[0].mxu0
    %1361 = vdwg.mxu0
    %1362 = vmatprep.subr.mxu0 %v807
    %1363 = vmatpush1.xpose.msra.mxu0 %v806
    %1364 = vmatprep.subr.mxu0 %v823
    %1365 = vmatpush1.xpose.msra.mxu0 %v822
    %1366 = vmatprep.subr.mxu0 %v839
    %1367 = vmatpush1.xpose.msra.mxu0 %v838
    %1368 = vmatprep.subr.mxu0 %v855
    %1369 = vmatpush1.xpose.msra.mxu0 %v854
    %1370 = vmatprep.subr.mxu0 0.0
    %1371 = vmatpush1.xpose.msra.mxu0 0.0
    %1372 = vmatprep.subr.mxu0 0.0
    %1373 = vmatpush1.xpose.msra.mxu0 0.0
    %1374 = vmatprep.subr.mxu0 0.0
    %1375 = vmatpush1.xpose.msra.mxu0 0.0
    %1376 = vmatprep.subr.mxu0 0.0
    %1377 = vmatpush1.xpose.msra.mxu0 0.0
    %1378 = vmatprep.subr.mxu0 0.0
    %1379 = vmatpush1.xpose.msra.mxu0 0.0
    %1380 = vmatprep.subr.mxu0 0.0
    %1381 = vmatpush1.xpose.msra.mxu0 0.0
    %1382 = vmatprep.subr.mxu0 0.0
    %1383 = vmatpush1.xpose.msra.mxu0 0.0
    %1384 = vmatprep.subr.mxu0 0.0
    %1385 = vmatpush1.xpose.msra.mxu0 0.0
    %1386 = vmatprep.subr.mxu0 0.0
    %1387 = vmatpush1.xpose.msra.mxu0 0.0
    %1388 = vmatprep.subr.mxu0 0.0
    %1389 = vmatpush1.xpose.msra.mxu0 0.0
    %1390 = vmatprep.subr.mxu0 0.0
    %1391 = vmatpush1.xpose.msra.mxu0 0.0
    %1392 = vmatprep.subr.mxu0 0.0
    %1393 = vmatpush1.xpose.msra.mxu0 0.0
    %1394 = vmatprep.subr.mxu0 0.0
    %1395 = vmatpush1.xpose.msra.mxu0 0.0
    %1396 = vmatprep.subr.mxu0 0.0
    %1397 = vmatpush1.xpose.msra.mxu0 0.0
    %1398 = vmatprep.subr.mxu0 0.0
    %1399 = vmatpush1.xpose.msra.mxu0 0.0
    %1400 = vmatprep.subr.mxu0 0.0
    %1401 = vmatpush1.xpose.msra.mxu0 0.0
    %1402 = vmatprep.subr.mxu0 0.0
    %1403 = vmatpush1.xpose.msra.mxu0 0.0
    %1404 = vmatprep.subr.mxu0 0.0
    %1405 = vmatpush1.xpose.msra.mxu0 0.0
    %1406 = vmatprep.subr.mxu0 0.0
    %1407 = vmatpush1.xpose.msra.mxu0 0.0
    %1408 = vmatprep.subr.mxu0 0.0
    %1409 = vmatpush1.xpose.msra.mxu0 0.0
    %1410 = vmatprep.subr.mxu0 0.0
    %1411 = vmatpush1.xpose.msra.mxu0 0.0
    %1412 = vmatprep.subr.mxu0 0.0
    %1413 = vmatpush1.xpose.msra.mxu0 0.0
    %1414 = vmatprep.subr.mxu0 0.0
    %1415 = vmatpush1.xpose.msra.mxu0 0.0
    %1416 = vmatprep.subr.mxu0 0.0
    %1417 = vmatpush1.xpose.msra.mxu0 0.0
    %1418 = vmatprep.subr.mxu0 0.0
    %1419 = vmatpush1.xpose.msra.mxu0 0.0
    %1420 = vmatprep.subr.mxu0 0.0
    %1421 = vmatpush1.xpose.msra.mxu0 0.0
    %1422 = vmatprep.subr.mxu0 0.0
    %1423 = vmatpush1.xpose.msra.mxu0 0.0
    %1424 = vmatprep.subr.mxu0 0.0
    %1425 = vmatpush1.xpose.msra.mxu0 0.0
    %1426 = vmatprep.mubr.f32.mxu0 %v871
    %1427 = vmatmul.mubr.f32.gmra.mrb[0].mxu0 %v870
    %v1428 = vpop.f32.mrb[0].mxu0
    %v1429 = vadd.f32 %v1359, %v1428
    %v1430 = vpop.f32.mrb[0].mxu0
    %1431 = vdwg.mxu0
    %vm1432 = vcmask 261120
    %1433 = vst.msk [vmem:[#allocation8] sm:$0xff] %vm1432, %v1429
    // Predicated region
    $region26: #{tpu_custom_call.1} parent=1 // pred_check
      _
    $region27: #{tpu_custom_call.1} parent=1 // pred_check_branch
      %1435 = sbr.rel (0) target = $region29
    $region28: #{tpu_custom_call.1} parent=1 // pred_region
      %s1437 = ssub.s32 128, 128
      %1438 = vsyncadd [#allocation4], %s1437
      %s1440 = sshll.u32 [#allocation8], 4
      %s1441 = int_to_ptr.vmem [resolvable:$true] %s1440
      %1443 = dma.vmem_to_hbm [thread:$0]  %s1441, 128, %s3, [#allocation4]
    $region29: #{tpu_custom_call.1} parent=1 // pred_fallthru
      _
    // Predicated region
    $region30: #{tpu_custom_call.1} parent=1 // pred_check
      _
    $region31: #{tpu_custom_call.1} parent=1 // pred_check_branch
      %1445 = sbr.rel (0) target = $region33
    $region32: #{tpu_custom_call.1} parent=1 // pred_region
      %1446 = dma.done [#allocation4], 128
    $region33: #{tpu_custom_call.1} parent=1 // pred_fallthru
      _
    %1447 = vsyncpa [#allocation3], 1
    %1448 = vsyncpa [#allocation6], 1
    %1449 = vsyncpa [#allocation4], 1

</llo_original>
